<compile_context>
chip_gen: v7x
topology: tpu7x:2x2x1
jax: 0.10.0
libtpu: 0.0.40
codegen_flags: <defaults>
</compile_context>

<pallas_src>
import jax
import jax.numpy as jnp
from jax.experimental import pallas as pl
from jax.experimental.pallas import tpu as pltpu


def _make_gather_rows_kernel(n_out: int):
    """Kernel: gather n_out rows of x (dim 0) directly HBM->HBM."""

    def kernel(idx_ref, x_hbm, o_hbm, sem):
        # Issue every row copy first so all DMAs are in flight, then wait.
        copies = []
        for i in range(n_out):  # n_out is static -> unrolled at trace time
            src = idx_ref[i]  # scalar read from SMEM (prefetched indices)
            cp = pltpu.make_async_copy(x_hbm.at[src], o_hbm.at[i], sem.at[i])
            cp.start()
            copies.append(cp)
        for cp in copies:
            cp.wait()

    return kernel


def index_select_dim0(x: jax.Array, indices: jax.Array) -> jax.Array:
    """Equivalent of torch.index_select(x, 0, indices) along dim 0."""
    n_out = int(indices.shape[0])
    n_src = int(x.shape[0])
    row_shape = tuple(x.shape[1:])

    # Scalar-prefetch requires int32; clamp so no DMA can go out of bounds.
    idx = jnp.clip(indices.astype(jnp.int32), 0, n_src - 1)

    itemsize = jnp.dtype(x.dtype).itemsize
    row_elems = 1
    for d in row_shape:
        row_elems *= int(d)
    bytes_accessed = 2 * n_out * row_elems * itemsize  # read + write per row

    grid_spec = pltpu.PrefetchScalarGridSpec(
        num_scalar_prefetch=1,
        grid=(1,),  # single step: all row copies issued inside one body
        in_specs=[pl.BlockSpec(memory_space=pl.ANY)],   # raw HBM ref, no auto-DMA
        out_specs=pl.BlockSpec(memory_space=pl.ANY),    # raw HBM ref, written by DMA
        scratch_shapes=[pltpu.SemaphoreType.DMA((n_out,))],
    )

    return pl.pallas_call(
        _make_gather_rows_kernel(n_out),
        out_shape=jax.ShapeDtypeStruct((n_out,) + row_shape, x.dtype),
        grid_spec=grid_spec,
        compiler_params=pltpu.CompilerParams(
            dimension_semantics=("arbitrary",),
            has_side_effects=True,  # output is written via explicit DMA
        ),
        cost_estimate=pl.CostEstimate(
            flops=0, transcendentals=0, bytes_accessed=bytes_accessed
        ),
    )(idx, x)


def index_select_model_forward(x: jax.Array) -> jax.Array:
    """Forward pass of IndexSelectModel: fixed indices [0, 2] along dim 0."""
    return index_select_dim0(x, jnp.array([0, 2], dtype=jnp.int32))


if __name__ == "__main__":
    key = jax.random.PRNGKey(0)
    # Need N >= 3 so index 2 is valid; trailing dims TPU-friendly (8, 128) so the
    # row copies are lane-dense 4 KiB slabs.
    x = jax.random.normal(key, (4, 8, 128), dtype=jnp.float32)

    out = index_select_model_forward(x)
    out = jax.block_until_ready(out)

    # Reference check (== torch.index_select(x, 0, [0, 2]) semantics).
    ref = x[jnp.array([0, 2])]
    assert out.shape == (2, 8, 128)
    assert out.dtype == x.dtype
    assert bool(jnp.array_equal(out, ref))

    print("KERNEL_OK")
</pallas_src>

<mosaic_0001>
module attributes {stable_mosaic.version = 11 : i64} {
  func.func @kernel(%arg0: i32, %arg1: memref<2xi32, #tpu.memory_space<smem>>, %arg2: memref<4x8x128xf32, #tpu.memory_space<any>>, %arg3: memref<2x8x128xf32, #tpu.memory_space<any>>, %arg4: memref<2x!tpu.dma_semaphore, #tpu.memory_space<semaphore_mem>>) attributes {dimension_semantics = [#tpu.dimension_semantics<arbitrary>], iteration_bounds = array<i64: 1>, scalar_prefetch = 1 : i64, scratch_operands = 1 : i64, tpu.core_type = #tpu.core_type<tc>, window_params = [{}, {}]} {
    %c0 = arith.constant 0 : index
    %0 = memref.load %arg1[%c0] : memref<2xi32, #tpu.memory_space<smem>>
    %c0_i32 = arith.constant 0 : i32
    %c0_i32_0 = arith.constant 0 : i32
    %c0_i32_1 = arith.constant 0 : i32
    %c0_i32_2 = arith.constant 0 : i32
    %1 = tpu.memref_slice %arg2[%0, %c0_i32_1, %c0_i32_2] : memref<4x8x128xf32, #tpu.memory_space<any>> -> memref<1x8x128xf32, #tpu.memory_space<any>>
    %2 = tpu.memref_squeeze %1 : memref<1x8x128xf32, #tpu.memory_space<any>> -> memref<8x128xf32, #tpu.memory_space<any>>
    %c0_i32_3 = arith.constant 0 : i32
    %c0_i32_4 = arith.constant 0 : i32
    %3 = tpu.memref_slice %arg3[%c0_i32, %c0_i32_3, %c0_i32_4] : memref<2x8x128xf32, #tpu.memory_space<any>> -> memref<1x8x128xf32, #tpu.memory_space<any>>
    %4 = tpu.memref_squeeze %3 : memref<1x8x128xf32, #tpu.memory_space<any>> -> memref<8x128xf32, #tpu.memory_space<any>>
    %5 = tpu.memref_slice %arg4[%c0_i32_0] : memref<2x!tpu.dma_semaphore, #tpu.memory_space<semaphore_mem>> -> memref<1x!tpu.dma_semaphore, #tpu.memory_space<semaphore_mem>>
    %6 = tpu.memref_squeeze %5 : memref<1x!tpu.dma_semaphore, #tpu.memory_space<semaphore_mem>> -> memref<!tpu.dma_semaphore, #tpu.memory_space<semaphore_mem>>
    tpu.enqueue_dma source(%2 : memref<8x128xf32, #tpu.memory_space<any>>) target(%4 : memref<8x128xf32, #tpu.memory_space<any>>) target_semaphore(%6 : memref<!tpu.dma_semaphore, #tpu.memory_space<semaphore_mem>>)
    %c1 = arith.constant 1 : index
    %7 = memref.load %arg1[%c1] : memref<2xi32, #tpu.memory_space<smem>>
    %c1_i32 = arith.constant 1 : i32
    %c1_i32_5 = arith.constant 1 : i32
    %c0_i32_6 = arith.constant 0 : i32
    %c0_i32_7 = arith.constant 0 : i32
    %8 = tpu.memref_slice %arg2[%7, %c0_i32_6, %c0_i32_7] : memref<4x8x128xf32, #tpu.memory_space<any>> -> memref<1x8x128xf32, #tpu.memory_space<any>>
    %9 = tpu.memref_squeeze %8 : memref<1x8x128xf32, #tpu.memory_space<any>> -> memref<8x128xf32, #tpu.memory_space<any>>
    %c0_i32_8 = arith.constant 0 : i32
    %c0_i32_9 = arith.constant 0 : i32
    %10 = tpu.memref_slice %arg3[%c1_i32, %c0_i32_8, %c0_i32_9] : memref<2x8x128xf32, #tpu.memory_space<any>> -> memref<1x8x128xf32, #tpu.memory_space<any>>
    %11 = tpu.memref_squeeze %10 : memref<1x8x128xf32, #tpu.memory_space<any>> -> memref<8x128xf32, #tpu.memory_space<any>>
    %12 = tpu.memref_slice %arg4[%c1_i32_5] : memref<2x!tpu.dma_semaphore, #tpu.memory_space<semaphore_mem>> -> memref<1x!tpu.dma_semaphore, #tpu.memory_space<semaphore_mem>>
    %13 = tpu.memref_squeeze %12 : memref<1x!tpu.dma_semaphore, #tpu.memory_space<semaphore_mem>> -> memref<!tpu.dma_semaphore, #tpu.memory_space<semaphore_mem>>
    tpu.enqueue_dma source(%9 : memref<8x128xf32, #tpu.memory_space<any>>) target(%11 : memref<8x128xf32, #tpu.memory_space<any>>) target_semaphore(%13 : memref<!tpu.dma_semaphore, #tpu.memory_space<semaphore_mem>>)
    %c0_i32_10 = arith.constant 0 : i32
    %c0_i32_11 = arith.constant 0 : i32
    %c0_i32_12 = arith.constant 0 : i32
    %c0_i32_13 = arith.constant 0 : i32
    %14 = tpu.memref_slice %arg2[%0, %c0_i32_12, %c0_i32_13] : memref<4x8x128xf32, #tpu.memory_space<any>> -> memref<1x8x128xf32, #tpu.memory_space<any>>
    %15 = tpu.memref_squeeze %14 : memref<1x8x128xf32, #tpu.memory_space<any>> -> memref<8x128xf32, #tpu.memory_space<any>>
    %c0_i32_14 = arith.constant 0 : i32
    %c0_i32_15 = arith.constant 0 : i32
    %16 = tpu.memref_slice %arg3[%c0_i32_10, %c0_i32_14, %c0_i32_15] : memref<2x8x128xf32, #tpu.memory_space<any>> -> memref<1x8x128xf32, #tpu.memory_space<any>>
    %17 = tpu.memref_squeeze %16 : memref<1x8x128xf32, #tpu.memory_space<any>> -> memref<8x128xf32, #tpu.memory_space<any>>
    %18 = tpu.memref_slice %arg4[%c0_i32_11] : memref<2x!tpu.dma_semaphore, #tpu.memory_space<semaphore_mem>> -> memref<1x!tpu.dma_semaphore, #tpu.memory_space<semaphore_mem>>
    %19 = tpu.memref_squeeze %18 : memref<1x!tpu.dma_semaphore, #tpu.memory_space<semaphore_mem>> -> memref<!tpu.dma_semaphore, #tpu.memory_space<semaphore_mem>>
    tpu.wait_dma2 semaphore(%19 : memref<!tpu.dma_semaphore, #tpu.memory_space<semaphore_mem>>) src(%15 : memref<8x128xf32, #tpu.memory_space<any>>) dst(%17 : memref<8x128xf32, #tpu.memory_space<any>>)
    %c1_i32_16 = arith.constant 1 : i32
    %c1_i32_17 = arith.constant 1 : i32
    %c0_i32_18 = arith.constant 0 : i32
    %c0_i32_19 = arith.constant 0 : i32
    %20 = tpu.memref_slice %arg2[%7, %c0_i32_18, %c0_i32_19] : memref<4x8x128xf32, #tpu.memory_space<any>> -> memref<1x8x128xf32, #tpu.memory_space<any>>
    %21 = tpu.memref_squeeze %20 : memref<1x8x128xf32, #tpu.memory_space<any>> -> memref<8x128xf32, #tpu.memory_space<any>>
    %c0_i32_20 = arith.constant 0 : i32
    %c0_i32_21 = arith.constant 0 : i32
    %22 = tpu.memref_slice %arg3[%c1_i32_16, %c0_i32_20, %c0_i32_21] : memref<2x8x128xf32, #tpu.memory_space<any>> -> memref<1x8x128xf32, #tpu.memory_space<any>>
    %23 = tpu.memref_squeeze %22 : memref<1x8x128xf32, #tpu.memory_space<any>> -> memref<8x128xf32, #tpu.memory_space<any>>
    %24 = tpu.memref_slice %arg4[%c1_i32_17] : memref<2x!tpu.dma_semaphore, #tpu.memory_space<semaphore_mem>> -> memref<1x!tpu.dma_semaphore, #tpu.memory_space<semaphore_mem>>
    %25 = tpu.memref_squeeze %24 : memref<1x!tpu.dma_semaphore, #tpu.memory_space<semaphore_mem>> -> memref<!tpu.dma_semaphore, #tpu.memory_space<semaphore_mem>>
    tpu.wait_dma2 semaphore(%25 : memref<!tpu.dma_semaphore, #tpu.memory_space<semaphore_mem>>) src(%21 : memref<8x128xf32, #tpu.memory_space<any>>) dst(%23 : memref<8x128xf32, #tpu.memory_space<any>>)
    return
  }
}

</mosaic_0001>

<llo_original>
// kernel: tpu_custom_call.1
$region0: #{tpu_custom_call.1}
  #allocation0 [shape = 'u32[]', space=smem, size = 0x4, offset = 0x4, fixed_abs, tag = 'smem constant byte address 0x4 - core index']
  #allocation1 [shape = 'u32[144,128]{1,0:T(1,128)}', space=vmem, size = 0x12000, scoped, tag = 'internal scratch']
  #allocation2 [shape = 's32[2]{0}', space=sflag, size = 0x8, scoped, tag = 'scratch operand']
  #allocation3 [shape = 's32[1]{0}', space=sflag, size = 0x4, scoped, tag = 'scoped memory for tpu_custom_call.1']
  #allocation4 [shape = 'u8[512]{0}', space=smem, size = 0x200, scoped, tag = 'prefetched SMEM operand 0']
  #allocation5 [shape = 's32[]', space=sflag, size = 0x4, offset = 0, fixed_abs, tag = 'sflag constant byte address 0x0 - dummy sync flag']
  #allocation6 [shape = 'u32[0]{0}', space=smem, size = 0, offset = 0, fixed_abs, tag = 'smem constant byte address 0x0 - null']
  #allocation7 [shape = 's32[]', space=sflag, size = 0x4, offset = 0, fixed_abs, tag = 'sflag constant byte address 0x0 - dummy sync flag']
  #allocation8 [shape = 'u32[0]{0}', space=smem, size = 0, offset = 0, fixed_abs, tag = 'smem constant byte address 0x0 - null']
  %s0 = inlined_call_operand.hbm [shape: s32[2], index: 0, kind: input, shape index: {}]
  %s1 = inlined_call_operand.hbm [shape: f32[4,8,128], index: 1, kind: input, shape index: {}]
  %s2 = inlined_call_operand.hbm [shape: f32[2,8,128], index: 2, kind: output, shape index: {}]
  %s3 = sld [smem:[#allocation0]]
  $region2: #{tpu_custom_call.1} parent=0
    _
  %s5 = ssub.s32 1, %s3
  %s6 = scalar_select 0, %s5, %s3
  %8 = dma.hbm_to_smem %s0, 16, [#allocation4], [#allocation3]
  %9 = dma.done [#allocation3], 16
  %10 = sfence
  %s11 = sld [smem:[#allocation4]]
  %s12 = smul.u32 %s11, 8
  %s13 = smul.addr %s12, 16
  %s14 = scalar_lea.hbm %s1, %s13
  %s16 = sshll.u32 1, 14
  %s17 = sxor.u32 4294967295, %s16
  %s20 = sshll.u32 3, 24
  %s21 = sxor.u32 4294967295, %s20
  %s22 = sand.u32 0, %s21
  %s24 = sor.u32 %s22, 0
  %27 = dma.general %s14, 128, %s2, [#allocation2], [#allocation5], [#allocation6], %s24, 0
  %s28 = sld [smem:[#allocation4 + $0x1]]
  %s29 = smul.u32 %s28, 8
  %s30 = smul.addr %s29, 16
  %s31 = scalar_lea.hbm %s1, %s30
  %s32 = scalar_lea.hbm %s2, 128
  %s33 = scalar_lea.sflag [#allocation2], 1
  %s35 = sshll.u32 1, 14
  %s36 = sxor.u32 4294967295, %s35
  %s39 = sshll.u32 3, 24
  %s40 = sxor.u32 4294967295, %s39
  %s41 = sand.u32 0, %s40
  %s43 = sor.u32 %s41, 0
  %46 = dma.general %s31, 128, %s32, %s33, [#allocation7], [#allocation8], %s43, 0
  %s47 = smul.u32 8, 1
  %s48 = sshll.u32 %s47, 4
  %49 = dma.done [#allocation2], %s48
  %s50 = sshll.u32 %s47, 4
  %51 = dma.done %s33, %s50
  %52 = vsyncmov [#allocation2]
  %s53 = vpop.sfrf %52
  %p54 = scmp.eq.s32.totalorder %s53, 0
  %p55 = pneg %p54
  %57 = shalt.err (%p55)
  %s58 = scalar_lea.sflag [#allocation2], 1
  %59 = vsyncmov %s58
  %s60 = vpop.sfrf %59
  %p61 = scmp.eq.s32.totalorder %s60, 0
  %p62 = pneg %p61
  %64 = shalt.err (%p62)

</llo_original>
